<compile_context>
chip_gen: v6e
topology: v6e:2x2x1
jax: 0.10.0
libtpu: 0.0.40
codegen_flags: <defaults>
</compile_context>

<pallas_src>
import numpy as np
import jax
import jax.numpy as jnp
from jax.experimental import pallas as pl
from jax.experimental.pallas import tpu as pltpu


# ----------------------------------------------------------------------------
# Pallas kernel: one (batch, anchor-tile, visible-tile) grid step.
#   u_ref  : (1, TILE_I, H)            compute dtype  anchor projection rows
#   v_ref  : (1, S_pad_j, H)           compute dtype  full visible projection
#   wfc_ref: (H, T_pad)                bf16           final fc weight (padded)
#   bfc_ref: (1, T_pad)                f32            final fc bias (padded)
#   o_ref  : (1, TILE_I, TILE_J, T_pad) f32           output block
# ----------------------------------------------------------------------------
def _pair_fc_kernel(u_ref, v_ref, wfc_ref, bfc_ref, o_ref):
    TILE_I = u_ref.shape[1]
    H = u_ref.shape[2]
    TILE_J = o_ref.shape[2]
    T_pad = o_ref.shape[3]
    it = pl.program_id(1)
    jt = pl.program_id(2)

    # Skip tiles that lie entirely below the diagonal (every pair has j < i):
    # nothing from them is gathered, so no tanh and no fc matmul is issued.
    @pl.when((jt + 1) * TILE_J > it * TILE_I)
    def _():
        j0 = pl.multiple_of(jt * TILE_J, TILE_J)
        u = u_ref[0]                                    # (TILE_I, H)
        v = v_ref[0, pl.ds(j0, TILE_J), :]              # (TILE_J, H)
        z = jnp.tanh(u[:, None, :] + v[None, :, :])     # (TILE_I, TILE_J, H)
        # TILE_J % 16 == 0 -> collapsing the two leading dims does not cross
        # sublane-tile boundaries (no relayout copy), and the fc stage stays
        # one big-M MXU matmul.
        z2 = z.reshape(TILE_I * TILE_J, H).astype(wfc_ref.dtype)
        out = jnp.dot(z2, wfc_ref[...], preferred_element_type=jnp.float32)
        out = out + bfc_ref[...]
        o_ref[0] = out.reshape(TILE_I, TILE_J, T_pad)


def _round_up(x, m):
    return (x + m - 1) // m * m


def _tpu_compute_config():
    """(compute_dtype, vmem_limit_bytes) chosen per TPU generation."""
    try:
        kind = jax.devices()[0].device_kind.lower()
    except Exception:
        kind = ""
    if any(g in kind for g in ("v2", "v3", "v4", "v5")):
        # pre-v6 VPU/EUP have no bf16: keep the add + tanh in f32;
        # 128 MiB-class physical VMEM -> raise the scoped limit.
        return jnp.float32, 100 * 1024 * 1024
    if "v6" in kind:
        return jnp.bfloat16, 100 * 1024 * 1024
    # v7x (64 MiB VMEM per TensorCore) and unknown parts: conservative budget.
    return jnp.bfloat16, 44 * 1024 * 1024


def _pick_tiles(S, H, T_pad, cbytes, budget_bytes):
    """Pick (TILE_I, TILE_J): TILE_I % 8 == 0, TILE_J % 16 == 0, fits budget."""
    cap_i = _round_up(S, 8)
    cap_j = _round_up(S, 16)

    def usage(ti, tj):
        s_pad_j = _round_up(S, tj)
        z = ti * tj * H * cbytes                          # tanh slab
        z_cast = ti * tj * H * 2 if cbytes == 4 else 0    # bf16 copy fed to MXU
        out_vmem = 3 * ti * tj * T_pad * 4                # f32 temp + 2 out buffers
        v_res = 2 * s_pad_j * H * cbytes                  # VMEM-resident V
        u_res = 2 * ti * H * cbytes
        w = 2 * (H * T_pad * 2 + T_pad * 4)               # Wfc + bfc
        return z + z_cast + out_vmem + v_res + u_res + w

    ti, tj = 8, 16
    grew = True
    while grew:
        grew = False
        for dti, dtj in ((0, 16), (8, 0)):
            nti, ntj = ti + dti, tj + dtj
            if nti <= cap_i and ntj <= cap_j and usage(nti, ntj) <= budget_bytes:
                ti, tj = nti, ntj
                grew = True
    return ti, tj


def handshaking_fc(last_hidden_state, wc1, wc2, bc, wfc, bfc, *,
                   tile_i=None, tile_j=None, vmem_limit_bytes=None):
    """last_hidden_state: (B, S, H) f32 -> (B, S*(S+1)//2, tag_size) f32."""
    B, S, H = last_hidden_state.shape
    T = wfc.shape[1]
    T_pad = _round_up(T, 128)          # lane-dense output stores (unmasked vst)

    compute_dtype, default_vmem = _tpu_compute_config()
    if vmem_limit_bytes is None:
        vmem_limit_bytes = default_vmem
    cbytes = jnp.dtype(compute_dtype).itemsize

    if tile_i is None or tile_j is None:
        pti, ptj = _pick_tiles(S, H, T_pad, cbytes,
                               budget_bytes=vmem_limit_bytes * 3 // 5)
        tile_i = tile_i or pti
        tile_j = tile_j or ptj
    assert tile_i % 8 == 0 and tile_j % 16 == 0

    ni = -(-S // tile_i)
    nj = -(-S // tile_j)
    S_pad_i = ni * tile_i
    S_pad_j = nj * tile_j

    # --- hoisted projections: once per forward, O(S*H^2), left to XLA -------
    h_bf = last_hidden_state.astype(jnp.bfloat16)
    U = jnp.einsum("bsh,hk->bsk", h_bf, wc1.astype(jnp.bfloat16),
                   preferred_element_type=jnp.float32)
    V = jnp.einsum("bsh,hk->bsk", h_bf, wc2.astype(jnp.bfloat16),
                   preferred_element_type=jnp.float32) + bc.reshape(1, 1, H)
    U = jnp.pad(U.astype(compute_dtype), ((0, 0), (0, S_pad_i - S), (0, 0)))
    V = jnp.pad(V.astype(compute_dtype), ((0, 0), (0, S_pad_j - S), (0, 0)))

    # Pad fc weight/bias so the kernel's output last dim is a multiple of 128.
    wfc_p = jnp.zeros((H, T_pad), jnp.float32).at[:, :T].set(wfc).astype(jnp.bfloat16)
    bfc_p = jnp.zeros((1, T_pad), jnp.float32).at[:, :T].set(bfc.reshape(1, -1))

    # Wfc/bfc/V have constant index maps along the inner axes, so Pallas only
    # re-DMAs them when their block index changes (once per batch for V).
    full = pl.pallas_call(
        _pair_fc_kernel,
        out_shape=jax.ShapeDtypeStruct((B, S_pad_i, S_pad_j, T_pad), jnp.float32),
        grid_spec=pltpu.PrefetchScalarGridSpec(
            num_scalar_prefetch=0,
            grid=(B, ni, nj),
            in_specs=[
                pl.BlockSpec((1, tile_i, H), lambda b, it, jt: (b, it, 0)),   # U rows
                pl.BlockSpec((1, S_pad_j, H), lambda b, it, jt: (b, 0, 0)),   # V, VMEM-resident
                pl.BlockSpec((H, T_pad), lambda b, it, jt: (0, 0)),           # Wfc
                pl.BlockSpec((1, T_pad), lambda b, it, jt: (0, 0)),           # bfc
            ],
            out_specs=pl.BlockSpec((1, tile_i, tile_j, T_pad),
                                   lambda b, it, jt: (b, it, jt, 0)),
        ),
        compiler_params=pltpu.CompilerParams(
            dimension_semantics=("parallel", "parallel", "arbitrary"),
            vmem_limit_bytes=vmem_limit_bytes,
        ),
    )(U, V, wfc_p, bfc_p)

    # TPLinker upper-triangular flattening ((0,0),(0,1),...,(S-1,S-1)).
    # Below-diagonal / padded blocks were skipped in-kernel and are never read.
    # TODO(synk): write the compacted triangle directly from the kernel
    # (scalar-prefetched per-row offsets) to halve output HBM writeback and
    # drop this gather; kept as a JAX gather over the padded dense block here.
    flat = full.reshape(B, S_pad_i * S_pad_j, T_pad)
    flat_idx = np.array([i * S_pad_j + j for i in range(S) for j in range(i, S)],
                        dtype=np.int32)
    return flat[:, jnp.asarray(flat_idx), :T]


# ----------------------------------------------------------------------------
# Encoder stand-in (glue).  The real `encoder` is an external multi-layer BERT
# module passed into TPLinkerPlusBert; here a deterministic embedding sum +
# LayerNorm produces `last_hidden_state` with the right shape/dtype.
# TODO(synk): full BERT self-attention stack is external to this module and is
# not translated; attention_mask therefore has no effect in this stand-in.
# ----------------------------------------------------------------------------
def encoder_stub(input_ids, attention_mask, token_type_ids, enc_params):
    del attention_mask
    word_emb, pos_emb, type_emb, ln_g, ln_b = enc_params
    S = input_ids.shape[1]
    x = (word_emb[input_ids]
         + pos_emb[jnp.arange(S)][None, :, :]
         + type_emb[token_type_ids])
    mu = x.mean(-1, keepdims=True)
    var = ((x - mu) ** 2).mean(-1, keepdims=True)
    x = (x - mu) / jnp.sqrt(var + 1e-12) * ln_g + ln_b
    return x.astype(jnp.float32)


def tplinker_plus_bert_forward(params, input_ids, attention_mask, token_type_ids):
    """Eval-mode forward: returns (outputs, sampled_tok_pair_indices=None)."""
    enc_params, (wc1, wc2, bc, wfc, bfc) = params
    last_hidden_state = encoder_stub(input_ids, attention_mask, token_type_ids,
                                     enc_params)
    outputs = handshaking_fc(last_hidden_state, wc1, wc2, bc, wfc, bfc)
    return outputs, None   # not training -> no token-pair sampling / gather


# ----------------------------------------------------------------------------
# Pure-JAX f32 reference of the handshaking + fc path (for correctness check).
# ----------------------------------------------------------------------------
def _reference_handshaking_fc(h, wc1, wc2, bc, wfc, bfc):
    B, S, H = h.shape
    pieces = []
    for i in range(S):
        rep = jnp.broadcast_to(h[:, i:i + 1, :], (B, S - i, H))
        vis = h[:, i:, :]
        z = jnp.tanh(rep @ wc1 + vis @ wc2 + bc)
        pieces.append(z)
    shaking = jnp.concatenate(pieces, axis=1)
    return shaking @ wfc + bfc


if __name__ == "__main__":
    B, S, H, T = 2, 8, 32, 8          # batch, seq_len, hidden_size, tag_size
    VOCAB, TYPES = 100, 2

    key = jax.random.PRNGKey(0)
    ks = jax.random.split(key, 12)

    # deterministic parameter init (synthetic; shapes from module __init__)
    word_emb = jax.random.normal(ks[0], (VOCAB, H), jnp.float32) * 0.02
    pos_emb = jax.random.normal(ks[1], (S, H), jnp.float32) * 0.02
    type_emb = jax.random.normal(ks[2], (TYPES, H), jnp.float32) * 0.02
    ln_g = jnp.ones((H,), jnp.float32)
    ln_b = jnp.zeros((H,), jnp.float32)
    enc_params = (word_emb, pos_emb, type_emb, ln_g, ln_b)

    # HandshakingKernel combine_fc: Linear(2H -> H), split into the two halves
    wc1 = jax.random.normal(ks[3], (H, H), jnp.float32) / np.sqrt(2 * H)
    wc2 = jax.random.normal(ks[4], (H, H), jnp.float32) / np.sqrt(2 * H)
    bc = jax.random.normal(ks[5], (1, H), jnp.float32) * 0.01
    # final fc: Linear(H -> tag_size)
    wfc = jax.random.normal(ks[6], (H, T), jnp.float32) / np.sqrt(H)
    bfc = jax.random.normal(ks[7], (1, T), jnp.float32) * 0.01
    params = (enc_params, (wc1, wc2, bc, wfc, bfc))

    # deterministic example inputs
    input_ids = jax.random.randint(ks[8], (B, S), 0, VOCAB, dtype=jnp.int32)
    attention_mask = jnp.ones((B, S), jnp.int32)
    token_type_ids = jnp.zeros((B, S), jnp.int32)

    outputs, sampled = tplinker_plus_bert_forward(
        params, input_ids, attention_mask, token_type_ids)
    outputs = jax.block_until_ready(outputs)

    assert outputs.shape == (B, S * (S + 1) // 2, T), outputs.shape
    assert sampled is None

    # correctness check against pure-JAX f32 reference (kernel uses bf16 MXU
    # operands / f32 accumulation and bf16 tanh on v6e+ -> loosened tolerance)
    last_hidden = encoder_stub(input_ids, attention_mask, token_type_ids, enc_params)
    ref = _reference_handshaking_fc(last_hidden, wc1, wc2, bc, wfc, bfc)
    np.testing.assert_allclose(np.asarray(outputs), np.asarray(ref),
                               rtol=3e-2, atol=3e-2)

    print("KERNEL_OK")
</pallas_src>

<mosaic_0001>
module attributes {stable_mosaic.version = 11 : i64} {
  func.func @_pair_fc_kernel(%arg0: i32, %arg1: i32, %arg2: i32, %arg3: memref<1x8x32xbf16, #tpu.memory_space<vmem>>, %arg4: memref<1x16x32xbf16, #tpu.memory_space<vmem>>, %arg5: memref<32x128xbf16, #tpu.memory_space<vmem>>, %arg6: memref<1x128xf32, #tpu.memory_space<vmem>>, %arg7: memref<1x8x16x128xf32, #tpu.memory_space<vmem>>) attributes {dimension_semantics = [#tpu.dimension_semantics<parallel>, #tpu.dimension_semantics<parallel>, #tpu.dimension_semantics<arbitrary>], iteration_bounds = array<i64: 2, 1, 1>, scalar_prefetch = 0 : i64, scratch_operands = 0 : i64, tpu.core_type = #tpu.core_type<tc>, window_params = [{transform_indices = @transform_0, window_bounds = array<i64: 1, 8, 32>}, {transform_indices = @transform_1, window_bounds = array<i64: 1, 16, 32>}, {pipeline_mode = #tpu.pipeline_mode<synchronous>, transform_indices = @transform_2, window_bounds = array<i64: 32, 128>}, {pipeline_mode = #tpu.pipeline_mode<synchronous>, transform_indices = @transform_3, window_bounds = array<i64: 1, 128>}, {transform_indices = @transform_4, window_bounds = array<i64: 1, 8, 16, 128>}]} {
    %c1_i32 = arith.constant 1 : i32
    %0 = arith.addi %arg2, %c1_i32 : i32
    %c16_i32 = arith.constant 16 : i32
    %1 = arith.muli %0, %c16_i32 : i32
    %c8_i32 = arith.constant 8 : i32
    %2 = arith.muli %arg1, %c8_i32 : i32
    %3 = arith.cmpi sgt, %1, %2 : i32
    %4 = arith.extui %3 : i1 to i32
    %c0_i32 = arith.constant 0 : i32
    %5 = arith.cmpi ne, %4, %c0_i32 : i32
    scf.if %5 {
      %c16_i32_0 = arith.constant 16 : i32
      %6 = arith.muli %arg2, %c16_i32_0 : i32
      %7 = tpu.assume_multiple %6, 16 : i32
      %c0 = arith.constant 0 : index
      %c0_1 = arith.constant 0 : index
      %c0_2 = arith.constant 0 : index
      %8 = vector.load %arg3[%c0, %c0_1, %c0_2] : memref<1x8x32xbf16, #tpu.memory_space<vmem>>, vector<1x8x32xbf16>
      %9 = vector.shape_cast %8 : vector<1x8x32xbf16> to vector<8x32xbf16>
      %c0_3 = arith.constant 0 : index
      %10 = arith.index_cast %7 : i32 to index
      %c0_4 = arith.constant 0 : index
      %11 = vector.load %arg4[%c0_3, %10, %c0_4] : memref<1x16x32xbf16, #tpu.memory_space<vmem>>, vector<1x16x32xbf16>
      %12 = vector.shape_cast %11 : vector<1x16x32xbf16> to vector<16x32xbf16>
      %13 = vector.shape_cast %9 : vector<8x32xbf16> to vector<8x1x32xbf16>
      %14 = vector.shape_cast %12 : vector<16x32xbf16> to vector<1x16x32xbf16>
      %15 = vector.broadcast %13 : vector<8x1x32xbf16> to vector<8x16x32xbf16>
      %16 = vector.broadcast %14 : vector<1x16x32xbf16> to vector<8x16x32xbf16>
      %17 = arith.addf %15, %16 : vector<8x16x32xbf16>
      %18 = math.tanh %17 : vector<8x16x32xbf16>
      %19 = vector.shape_cast %18 : vector<8x16x32xbf16> to vector<128x32xbf16>
      %c0_5 = arith.constant 0 : index
      %c0_6 = arith.constant 0 : index
      %20 = vector.load %arg5[%c0_5, %c0_6] : memref<32x128xbf16, #tpu.memory_space<vmem>>, vector<32x128xbf16>
      %cst = arith.constant dense<0.000000e+00> : vector<128x128xf32>
      %21 = tpu.matmul %19, %20, %cst {dimension_numbers = #tpu.dot_dimension_numbers<[1], [0], [0], [1], [0, 0, 1, 1], [], []>} : vector<128x32xbf16>, vector<32x128xbf16>, vector<128x128xf32> -> vector<128x128xf32>
      %c0_7 = arith.constant 0 : index
      %c0_8 = arith.constant 0 : index
      %22 = vector.load %arg6[%c0_7, %c0_8] : memref<1x128xf32, #tpu.memory_space<vmem>>, vector<1x128xf32>
      %23 = vector.broadcast %22 : vector<1x128xf32> to vector<128x128xf32>
      %24 = arith.addf %21, %23 : vector<128x128xf32>
      %25 = vector.shape_cast %24 : vector<128x128xf32> to vector<8x16x128xf32>
      %c0_9 = arith.constant 0 : index
      %c0_10 = arith.constant 0 : index
      %c0_11 = arith.constant 0 : index
      %c0_12 = arith.constant 0 : index
      %26 = vector.load %arg7[%c0_9, %c0_10, %c0_11, %c0_12] : memref<1x8x16x128xf32, #tpu.memory_space<vmem>>, vector<1x8x16x128xf32>
      %27 = vector.shape_cast %26 : vector<1x8x16x128xf32> to vector<8x16x128xf32>
      %28 = vector.shape_cast %25 : vector<8x16x128xf32> to vector<1x8x16x128xf32>
      tpu.vector_store %arg7[%c0_9, %c0_10, %c0_11, %c0_12], %28 {strides = array<i32>} : memref<1x8x16x128xf32, #tpu.memory_space<vmem>>, vector<1x8x16x128xf32>,
    } else {
    }
    return
  }
  func.func @transform_0(%arg0: i32, %arg1: i32, %arg2: i32) -> (i32, i32, i32) {
    %c0_i32 = arith.constant 0 : i32
    %c0_i32_0 = arith.constant 0 : i32
    return %arg0, %arg1, %c0_i32 : i32, i32, i32
  }
  func.func @transform_1(%arg0: i32, %arg1: i32, %arg2: i32) -> (i32, i32, i32) {
    %c0_i32 = arith.constant 0 : i32
    %c0_i32_0 = arith.constant 0 : i32
    %c0_i32_1 = arith.constant 0 : i32
    return %arg0, %c0_i32, %c0_i32_0 : i32, i32, i32
  }
  func.func @transform_2(%arg0: i32, %arg1: i32, %arg2: i32) -> (i32, i32) {
    %c0_i32 = arith.constant 0 : i32
    %c0_i32_0 = arith.constant 0 : i32
    %c0_i32_1 = arith.constant 0 : i32
    return %c0_i32, %c0_i32_0 : i32, i32
  }
  func.func @transform_3(%arg0: i32, %arg1: i32, %arg2: i32) -> (i32, i32) {
    %c0_i32 = arith.constant 0 : i32
    %c0_i32_0 = arith.constant 0 : i32
    %c0_i32_1 = arith.constant 0 : i32
    return %c0_i32, %c0_i32_0 : i32, i32
  }
  func.func @transform_4(%arg0: i32, %arg1: i32, %arg2: i32) -> (i32, i32, i32, i32) {
    %c0_i32 = arith.constant 0 : i32
    %c0_i32_0 = arith.constant 0 : i32
    return %arg0, %arg1, %arg2, %c0_i32 : i32, i32, i32, i32
  }
}

</mosaic_0001>

<llo_original>
// kernel: tpu_custom_call.1
$region0: #{tpu_custom_call.1}
  #allocation0 [shape = 'u32[]', space=smem, size = 0x4, offset = 0x4, fixed_abs, tag = 'smem constant byte address 0x4 - core index']
  #allocation1 [shape = 'u32[144,128]{1,0:T(1,128)}', space=vmem, size = 0x12000, scoped, tag = 'internal scratch']
  %s0 = inlined_call_operand.hbm [shape: bf16[2,8,32], index: 0, kind: input, shape index: {}]
  %s1 = inlined_call_operand.hbm [shape: bf16[2,16,32], index: 1, kind: input, shape index: {}]
  %s2 = inlined_call_operand.hbm [shape: bf16[32,128], index: 2, kind: input, shape index: {}]
  %s3 = inlined_call_operand.vmem [shape: f32[1,128], index: 3, kind: input, shape index: {}]
  %s4 = inlined_call_operand.hbm [shape: f32[2,8,16,128], index: 4, kind: output, shape index: {}]
  %s5 = sld [smem:[#allocation0]]
  $region65: #{tpu_custom_call.1} parent=0
    _
  %s7 = ssub.s32 1, %s5
  %s8 = scalar_select 0, %s7, %s5
  $region1: #{tpu_custom_call.1} parent=0
    #allocation2 [shape = 'u8[4096]{0}', space=vmem, size = 0x1000, scoped, tag = 'input window, operand 0']
    #allocation3 [shape = 's32[2]{0}', space=sflag, size = 0x8, scoped, tag = 'scoped memory for tpu_custom_call.1']
    #allocation4 [shape = 's32[2]{0}', space=sflag, size = 0x8, scoped, tag = 'scoped memory for tpu_custom_call.1']
    #allocation5 [shape = 'u8[8192]{0}', space=vmem, size = 0x2000, scoped, tag = 'input window, operand 1']
    #allocation6 [shape = 's32[2]{0}', space=sflag, size = 0x8, scoped, tag = 'scoped memory for tpu_custom_call.1']
    #allocation7 [shape = 'u8[8192]{0}', space=vmem, size = 0x2000, scoped, tag = 'input window, operand 2, single buffered']
    #allocation8 [shape = 'u8[131072]{0}', space=vmem, size = 0x20000, scoped, tag = 'output window, operand 0']
    %9 = vsyncpa [#allocation3], 0
    %s10 = scalar_lea.sflag [#allocation3], 1
    %11 = vsyncpa %s10, 0
    %12 = vsyncpa [#allocation6], 0
    %s13 = scalar_lea.sflag [#allocation6], 1
    %14 = vsyncpa %s13, 0
    %15 = vsyncpa [#allocation4], 0
    %s16 = scalar_lea.sflag [#allocation4], 1
    %17 = vsyncpa %s16, 0
    loop: start=0, step=1, limit=4
    $region2: #{tpu_custom_call.1} parent=1 // loop_pre_header
      _
    $region3: #{tpu_custom_call.1} parent=1 // loop_header
      %s19 = sphi 0, %s23
      %p20 = scmp.ge.s32.totalorder %s19, 4
      %s26 = sphi 0, %s45
      %s27 = sphi 0, %s41
      %s28 = sphi 0, %s37
      %s29 = sphi 0, %s26
      %s30 = sphi 0, %s27
      %s31 = sphi 0, %s28
      %s32 = sphi 0, %s29
      %s33 = sphi 0, %s30
      %s34 = sphi 0, %s31
      %s50 = sphi 0, %s52
      %s53 = sphi 0, %s50
      %s54 = sphi 0, %s53
      %s70 = sphi 0, %s54
      %s76 = sphi 0, %s78
      %s79 = sphi 0, %s76
      %s80 = sphi 0, %s79
      %s96 = sphi 0, %s80
      %s100 = sphi 0, %s100
      %s102 = sphi 0, %s100
      %s103 = sphi 0, %s102
      %s117 = sphi 0, %s103
      %s121 = sphi 0, %s121
      %s123 = sphi 0, %s121
      %s124 = sphi 0, %s123
      %s138 = sphi 0, %s124
      %s148 = sphi 0, %s150
      %s151 = sphi 0, %s148
      %s152 = sphi 0, %s151
      %s168 = sphi 0, %s152
    $region4: #{tpu_custom_call.1} parent=1 // loop_header_branch
      %22 = sbr.rel (%p20) target = $region8
    $region5: #{tpu_custom_call.1} parent=1 // loop_body
      %s24 = ssub.s32 %s19, 1
      %s25 = ssub.s32 %s19, 2
      %s35 = sadd.s32 1, %s28
      %p36 = scmp.ge.s32.totalorder %s35, 1
      %s37 = scalar_select %p36, 0, %s35
      %s38 = sadd.s32 1, %s27
      %s39 = scalar_select %p36, %s38, %s27
      %p40 = scmp.ge.s32.totalorder %s39, 1
      %s41 = scalar_select %p40, 0, %s39
      %s42 = sadd.s32 1, %s26
      %s43 = scalar_select %p40, %s42, %s26
      %p44 = scmp.ge.s32.totalorder %s43, 2
      %s45 = scalar_select %p44, 0, %s43
      %s46 = ssub.s32 %s26, %s45
      %s47 = ssub.s32 %s27, %s41
      %s48 = sor.u32 %s46, %s47
      %p49 = scmp.eq.s32.totalorder %s48, 0
      %s51 = sadd.s32 %s50, 1
      %s52 = scalar_select %p49, %s50, %s51
      %p55 = pneg %p49
      %p56 = scmp.eq.s32.totalorder %s19, 1
      %p57 = por %p55, %p56
      %p58 = scmp.ne.s32.totalorder %s50, %s53
      %p59 = scmp.eq.s32.totalorder %s19, 0
      %p60 = por %p58, %p59
      %p61 = scmp.ne.s32.totalorder %s50, %s53
      %p62 = scmp.eq.s32.totalorder %s24, 1
      %p63 = por %p61, %p62
      %p64 = scmp.ne.s32.totalorder %s53, %s54
      %p65 = scmp.eq.s32.totalorder %s24, 0
      %p66 = por %p64, %p65
      %p67 = scmp.ne.s32.totalorder %s53, %s54
      %p68 = scmp.eq.s32.totalorder %s25, 1
      %p69 = por %p67, %p68
      %p71 = scmp.ne.s32.totalorder %s54, %s70
      %p72 = scmp.eq.s32.totalorder %s25, 0
      %p73 = por %p71, %p72
      %s74 = ssub.s32 %s26, %s45
      %p75 = scmp.eq.s32.totalorder %s74, 0
      %s77 = sadd.s32 %s76, 1
      %s78 = scalar_select %p75, %s76, %s77
      %p81 = pneg %p75
      %p82 = scmp.eq.s32.totalorder %s19, 1
      %p83 = por %p81, %p82
      %p84 = scmp.ne.s32.totalorder %s76, %s79
      %p85 = scmp.eq.s32.totalorder %s19, 0
      %p86 = por %p84, %p85
      %p87 = scmp.ne.s32.totalorder %s76, %s79
      %p88 = scmp.eq.s32.totalorder %s24, 1
      %p89 = por %p87, %p88
      %p90 = scmp.ne.s32.totalorder %s79, %s80
      %p91 = scmp.eq.s32.totalorder %s24, 0
      %p92 = por %p90, %p91
      %p93 = scmp.ne.s32.totalorder %s79, %s80
      %p94 = scmp.eq.s32.totalorder %s25, 1
      %p95 = por %p93, %p94
      %p97 = scmp.ne.s32.totalorder %s80, %s96
      %p98 = scmp.eq.s32.totalorder %s25, 0
      %p99 = por %p97, %p98
      %s101 = sadd.s32 %s100, 1
      %p104 = scmp.eq.s32.totalorder %s19, 1
      %p105 = scmp.ne.s32.totalorder %s100, %s102
      %p106 = scmp.eq.s32.totalorder %s19, 0
      %p107 = por %p105, %p106
      %p108 = scmp.ne.s32.totalorder %s100, %s102
      %p109 = scmp.eq.s32.totalorder %s24, 1
      %p110 = por %p108, %p109
      %p111 = scmp.ne.s32.totalorder %s102, %s103
      %p112 = scmp.eq.s32.totalorder %s24, 0
      %p113 = por %p111, %p112
      %p114 = scmp.ne.s32.totalorder %s102, %s103
      %p115 = scmp.eq.s32.totalorder %s25, 1
      %p116 = por %p114, %p115
      %p118 = scmp.ne.s32.totalorder %s103, %s117
      %p119 = scmp.eq.s32.totalorder %s25, 0
      %p120 = por %p118, %p119
      %s122 = sadd.s32 %s121, 1
      %p125 = scmp.eq.s32.totalorder %s19, 1
      %p126 = scmp.ne.s32.totalorder %s121, %s123
      %p127 = scmp.eq.s32.totalorder %s19, 0
      %p128 = por %p126, %p127
      %p129 = scmp.ne.s32.totalorder %s121, %s123
      %p130 = scmp.eq.s32.totalorder %s24, 1
      %p131 = por %p129, %p130
      %p132 = scmp.ne.s32.totalorder %s123, %s124
      %p133 = scmp.eq.s32.totalorder %s24, 0
      %p134 = por %p132, %p133
      %p135 = scmp.ne.s32.totalorder %s123, %s124
      %p136 = scmp.eq.s32.totalorder %s25, 1
      %p137 = por %p135, %p136
      %p139 = scmp.ne.s32.totalorder %s124, %s138
      %p140 = scmp.eq.s32.totalorder %s25, 0
      %p141 = por %p139, %p140
      %s142 = ssub.s32 %s26, %s45
      %s143 = ssub.s32 %s27, %s41
      %s144 = sor.u32 %s142, %s143
      %s145 = ssub.s32 %s28, %s37
      %s146 = sor.u32 %s144, %s145
      %p147 = scmp.eq.s32.totalorder %s146, 0
      %s149 = sadd.s32 %s148, 1
      %s150 = scalar_select %p147, %s148, %s149
      %p153 = pneg %p147
      %p154 = scmp.eq.s32.totalorder %s19, 1
      %p155 = por %p153, %p154
      %p156 = scmp.ne.s32.totalorder %s148, %s151
      %p157 = scmp.eq.s32.totalorder %s19, 0
      %p158 = por %p156, %p157
      %p159 = scmp.ne.s32.totalorder %s148, %s151
      %p160 = scmp.eq.s32.totalorder %s24, 1
      %p161 = por %p159, %p160
      %p162 = scmp.ne.s32.totalorder %s151, %s152
      %p163 = scmp.eq.s32.totalorder %s24, 0
      %p164 = por %p162, %p163
      %p165 = scmp.ne.s32.totalorder %s151, %s152
      %p166 = scmp.eq.s32.totalorder %s25, 1
      %p167 = por %p165, %p166
      %p169 = scmp.ne.s32.totalorder %s152, %s168
      %p170 = scmp.eq.s32.totalorder %s25, 0
      %p171 = por %p169, %p170
      %p172 = scmp.le.s32.totalorder 1, %s19
      %p173 = scmp.lt.s32.totalorder %s19, 3
      %p174 = pnand %p172, %p173
      %p175 = pneg %p174
      // Predicated region
      $region9: #{tpu_custom_call.1} parent=5 // pred_check
        _
      $region10: #{tpu_custom_call.1} parent=5 // pred_check_branch
        %177 = sbr.rel (%p174) target = $region12
      $region11: #{tpu_custom_call.1} parent=5 // pred_region
        %s178 = ssub.s32 %s19, 1
        // Predicated region
        $region13: #{tpu_custom_call.1} parent=11 // pred_check
          %p179 = pneg %p113
        $region14: #{tpu_custom_call.1} parent=11 // pred_check_branch
          %181 = sbr.rel (%p179) target = $region16
        $region15: #{tpu_custom_call.1} parent=11 // pred_region
          %s183 = ssub.s32 256, 256
          %184 = vsyncadd [#allocation6], %s183
          %s185 = sshll.u32 [#allocation7], 4
          %s186 = int_to_ptr.vmem [resolvable:$true] %s185
          %191 = dma.hbm_to_vmem [thread:$0]  %s2, 256, %s186, [#allocation6], 64, 64, 4
        $region16: #{tpu_custom_call.1} parent=11 // pred_fallthru
          _
        // Predicated region
        $region17: #{tpu_custom_call.1} parent=11 // pred_check
          %p192 = pneg %p134
        $region18: #{tpu_custom_call.1} parent=11 // pred_check_branch
          %194 = sbr.rel (%p192) target = $region20
        $region19: #{tpu_custom_call.1} parent=11 // pred_region
          _
        $region20: #{tpu_custom_call.1} parent=11 // pred_fallthru
          _
      $region12: #{tpu_custom_call.1} parent=5 // pred_fallthru
        _
      %p195 = scmp.lt.s32.totalorder %s19, 2
      // Predicated region
      $region21: #{tpu_custom_call.1} parent=5 // pred_check
        %p196 = pneg %p195
      $region22: #{tpu_custom_call.1} parent=5 // pred_check_branch
        %198 = sbr.rel (%p196) target = $region24
      $region23: #{tpu_custom_call.1} parent=5 // pred_region
        // Predicated region
        $region25: #{tpu_custom_call.1} parent=23 // pred_check
          %p199 = pneg %p60
        $region26: #{tpu_custom_call.1} parent=23 // pred_check_branch
          %201 = sbr.rel (%p199) target = $region28
        $region27: #{tpu_custom_call.1} parent=23 // pred_region
          %s202 = sand.u32 %s50, 1
          %s203 = scalar_lea.sflag [#allocation3], %s202
          %s204 = sand.u32 %s50, 1
          %s205 = smul.addr %s204, 4
          %s206 = scalar_lea.vmem [#allocation2], %s205
          %s208 = ssub.s32 64, 64
          %209 = vsyncadd %s203, %s208
          %s210 = sadd.s32 %s27, %s26
          %s211 = smul.addr %s210, 64
          %s212 = scalar_lea.hbm %s0, %s211
          %s214 = sshll.u32 %s206, 4
          %s215 = int_to_ptr.vmem [resolvable:$true] %s214
          %217 = dma.hbm_to_vmem [thread:$0]  %s212, 64, %s215, %s203
        $region28: #{tpu_custom_call.1} parent=23 // pred_fallthru
          _
        // Predicated region
        $region29: #{tpu_custom_call.1} parent=23 // pred_check
          %p218 = pneg %p86
        $region30: #{tpu_custom_call.1} parent=23 // pred_check_branch
          %220 = sbr.rel (%p218) target = $region32
        $region31: #{tpu_custom_call.1} parent=23 // pred_region
          %s221 = sand.u32 %s19, 1
          %s222 = scalar_lea.sflag [#allocation6], %s221
          %s223 = sand.u32 %s76, 1
          %s224 = smul.addr %s223, 8
          %s225 = scalar_lea.vmem [#allocation5], %s224
          %s227 = ssub.s32 128, 128
          %228 = vsyncadd %s222, %s227
          %s229 = smul.addr %s26, 2
          %s230 = smul.addr %s229, 64
          %s231 = scalar_lea.hbm %s1, %s230
          %s232 = sshll.u32 %s225, 4
          %s233 = int_to_ptr.vmem [resolvable:$true] %s232
          %238 = dma.hbm_to_vmem [thread:$0]  %s231, 128, %s233, %s222, 64, 64, 4
        $region32: #{tpu_custom_call.1} parent=23 // pred_fallthru
          _
      $region24: #{tpu_custom_call.1} parent=5 // pred_fallthru
        _
      %p239 = scmp.le.s32.totalorder 1, %s19
      %p240 = scmp.lt.s32.totalorder %s19, 3
      %p241 = pnand %p239, %p240
      %p242 = pneg %p241
      // Predicated region
      $region33: #{tpu_custom_call.1} parent=5 // pred_check
        _
      $region34: #{tpu_custom_call.1} parent=5 // pred_check_branch
        %244 = sbr.rel (%p241) target = $region36
      $region35: #{tpu_custom_call.1} parent=5 // pred_region
        %s245 = ssub.s32 %s19, 1
        %s246 = sand.u32 %s53, 1
        %s247 = scalar_lea.sflag [#allocation3], %s246
        %s248 = sand.u32 %s53, 1
        %s249 = smul.addr %s248, 4
        %s250 = scalar_lea.vmem [#allocation2], %s249
        // Predicated region
        $region37: #{tpu_custom_call.1} parent=35 // pred_check
          %p251 = pneg %p66
        $region38: #{tpu_custom_call.1} parent=35 // pred_check_branch
          %253 = sbr.rel (%p251) target = $region40
        $region39: #{tpu_custom_call.1} parent=35 // pred_region
          %254 = dma.done %s247, 64
        $region40: #{tpu_custom_call.1} parent=35 // pred_fallthru
          _
        %s255 = sand.u32 %s24, 1
        %s256 = scalar_lea.sflag [#allocation6], %s255
        %s257 = sand.u32 %s79, 1
        %s258 = smul.addr %s257, 8
        %s259 = scalar_lea.vmem [#allocation5], %s258
        // Predicated region
        $region41: #{tpu_custom_call.1} parent=35 // pred_check
          %p260 = pneg %p92
        $region42: #{tpu_custom_call.1} parent=35 // pred_check_branch
          %262 = sbr.rel (%p260) target = $region44
        $region43: #{tpu_custom_call.1} parent=35 // pred_region
          %263 = dma.done %s256, 128
        $region44: #{tpu_custom_call.1} parent=35 // pred_fallthru
          _
        // Predicated region
        $region45: #{tpu_custom_call.1} parent=35 // pred_check
          %p264 = pneg %p113
        $region46: #{tpu_custom_call.1} parent=35 // pred_check_branch
          %266 = sbr.rel (%p264) target = $region48
        $region47: #{tpu_custom_call.1} parent=35 // pred_region
          %267 = dma.done [#allocation6], 256
        $region48: #{tpu_custom_call.1} parent=35 // pred_fallthru
          _
        %s268 = sand.u32 %s53, 1
        %s269 = scalar_lea.sflag [#allocation3], %s268
        %s270 = sand.u32 %s53, 1
        %s271 = smul.addr %s270, 4
        %s272 = scalar_lea.vmem [#allocation2], %s271
        %p273 = pneg %p66
        %p274 = pneg %p63
        %s275 = sand.u32 %s24, 1
        %s276 = scalar_lea.sflag [#allocation6], %s275
        %s277 = sand.u32 %s79, 1
        %s278 = smul.addr %s277, 8
        %s279 = scalar_lea.vmem [#allocation5], %s278
        %p280 = pneg %p92
        %p281 = pneg %p89
        %p282 = pneg %p113
        %p283 = pneg %p110
        %p284 = pneg %p134
        %p285 = pneg %p131
        %p286 = pneg %p164
        %p287 = pneg %p161
        %s288 = sand.u32 %s151, 1
        %s289 = scalar_lea.sflag [#allocation4], %s288
        %s290 = sand.u32 %s151, 1
        %s291 = smul.addr %s290, 128
        %s292 = scalar_lea.vmem [#allocation8], %s291
        %s293 = smul.u32 8, %s30
        %s294 = smul.u32 2, %s31
        %s296 = sadd.s32 %s31, 1
        %s297 = smul.u32 %s296, 16
        %s298 = smul.u32 %s30, 8
        %p299 = scmp.gt.s32.totalorder %s297, %s298
        // Predicated region
        $region49: #{tpu_custom_call.1} parent=35 // pred_check
          %p300 = pneg %p299
        $region50: #{tpu_custom_call.1} parent=35 // pred_check_branch
          %302 = sbr.rel (%p300) target = $region52
        $region51: #{tpu_custom_call.1} parent=35 // pred_region
          %s303 = smul.u32 %s31, 16
          %v304 = vld [vmem:[%s250] sm:$0xf]
          %s305 = sshra.s32 %s303, 3
          %s306 = sand.u32 %s303, 7
          %s307 = smul.addr %s305, 4
          %s308 = scalar_lea.vmem %s259, %s307 [#allocation5]
          %v309 = vld [vmem:[%s308] sm:$0xf]
          %v310 = vld [vmem:[%s308 + $0x4] sm:$0xf]
          %v313 = vunpack.c.l.s4 1966171168
          %v314 = vunpack.c.0.s8 %v313
          %v315 = vlaneseq
          %v316 = vshrl.u32 %v315, 7
          %v317 = vsub.s32 %v314, %v316
          %v318 = vrot.slane %v304, %v317
          %v319 = vcombine.high %v318, %v318
          %v321 = vunpack.c.l.s4 1966171168
          %v322 = vunpack.c.0.s8 %v321
          %v323 = vlaneseq
          %v324 = vshrl.u32 %v323, 7
          %v325 = vsub.s32 %v322, %v324
          %v326 = vrot.slane %v318, %v325
          %v328 = vunpack.c.l.s4 1966171168
          %v329 = vunpack.c.0.s8 %v328
          %v330 = vlaneseq
          %v331 = vshrl.u32 %v330, 7
          %v332 = vsub.s32 %v329, %v331
          %v333 = vrot.slane %v319, %v332
          %v334 = vcombine.high %v326, %v326
          %v335 = vcombine.high %v333, %v333
          %v336 = vunpack.i.l.s16 %v326
          %v337 = vunpack.i.h.s16 %v326
          %v338 = vunpack.i.l.s16 %v333
          %v339 = vunpack.i.h.s16 %v333
          %v340 = vunpack.i.l.s16 %v334
          %v341 = vunpack.i.h.s16 %v334
          %v342 = vunpack.i.l.s16 %v335
          %v343 = vunpack.i.h.s16 %v335
          %v344 = vpack.i.b16 %v336, %v336
          %v345 = vpack.i.b16 %v337, %v337
          %v346 = vpack.i.b16 %v338, %v338
          %v347 = vpack.i.b16 %v339, %v339
          %v348 = vpack.i.b16 %v340, %v340
          %v349 = vpack.i.b16 %v341, %v341
          %v350 = vpack.i.b16 %v342, %v342
          %v351 = vpack.i.b16 %v343, %v343
          %v352 = vlaneseq
          %v353 = vshrl.u32 %v352, 7
          %v354 = vsub.s32 0, %v353
          %v355 = vrot.slane %v344, %v354
          %v356 = vlaneseq
          %v357 = vshrl.u32 %v356, 7
          %v358 = vsub.s32 0, %v357
          %v359 = vrot.slane %v345, %v358
          %v360 = vlaneseq
          %v361 = vshrl.u32 %v360, 7
          %v362 = vsub.s32 0, %v361
          %v363 = vrot.slane %v346, %v362
          %v364 = vlaneseq
          %v365 = vshrl.u32 %v364, 7
          %v366 = vsub.s32 0, %v365
          %v367 = vrot.slane %v347, %v366
          %v368 = vlaneseq
          %v369 = vshrl.u32 %v368, 7
          %v370 = vsub.s32 0, %v369
          %v371 = vrot.slane %v348, %v370
          %v372 = vlaneseq
          %v373 = vshrl.u32 %v372, 7
          %v374 = vsub.s32 0, %v373
          %v375 = vrot.slane %v349, %v374
          %v376 = vlaneseq
          %v377 = vshrl.u32 %v376, 7
          %v378 = vsub.s32 0, %v377
          %v379 = vrot.slane %v350, %v378
          %v380 = vlaneseq
          %v381 = vshrl.u32 %v380, 7
          %v382 = vsub.s32 0, %v381
          %v383 = vrot.slane %v351, %v382
          %v385 = vpack.i.b16 %v355, %v355
          %v387 = vlaneseq
          %v388 = vshrl.u32 %v387, 7
          %v389 = vsub.s32 0, %v388
          %v390 = vrot.slane %v385, %v389
          %v392 = vpack.i.b16 %v359, %v359
          %v394 = vlaneseq
          %v395 = vshrl.u32 %v394, 7
          %v396 = vsub.s32 0, %v395
          %v397 = vrot.slane %v392, %v396
          %v399 = vpack.i.b16 %v363, %v363
          %v401 = vlaneseq
          %v402 = vshrl.u32 %v401, 7
          %v403 = vsub.s32 0, %v402
          %v404 = vrot.slane %v399, %v403
          %v406 = vpack.i.b16 %v367, %v367
          %v408 = vlaneseq
          %v409 = vshrl.u32 %v408, 7
          %v410 = vsub.s32 0, %v409
          %v411 = vrot.slane %v406, %v410
          %v413 = vpack.i.b16 %v371, %v371
          %v415 = vlaneseq
          %v416 = vshrl.u32 %v415, 7
          %v417 = vsub.s32 0, %v416
          %v418 = vrot.slane %v413, %v417
          %v420 = vpack.i.b16 %v375, %v375
          %v422 = vlaneseq
          %v423 = vshrl.u32 %v422, 7
          %v424 = vsub.s32 0, %v423
          %v425 = vrot.slane %v420, %v424
          %v427 = vpack.i.b16 %v379, %v379
          %v429 = vlaneseq
          %v430 = vshrl.u32 %v429, 7
          %v431 = vsub.s32 0, %v430
          %v432 = vrot.slane %v427, %v431
          %v434 = vpack.i.b16 %v383, %v383
          %v436 = vlaneseq
          %v437 = vshrl.u32 %v436, 7
          %v438 = vsub.s32 0, %v437
          %v439 = vrot.slane %v434, %v438
          %v442 = vunpack.c.l.b16 %v309
          %v443 = vunpack.c.l.b16 %v310
          %v444 = vpack.c.b16 %v443, %v442
          %v446 = vadd.bf16 %v390, %v444
          %v447 = vadd.bf16 %v397, %v444
          %v448 = vadd.bf16 %v404, %v444
          %v449 = vadd.bf16 %v411, %v444
          %v450 = vadd.bf16 %v418, %v444
          %v451 = vadd.bf16 %v425, %v444
          %v452 = vadd.bf16 %v432, %v444
          %v453 = vadd.bf16 %v439, %v444
          %v454 = vtanh.bf16.pop %v446
          %v455 = vtanh.bf16.pop %v447
          %v456 = vtanh.bf16.pop %v448
          %v457 = vtanh.bf16.pop %v449
          %v458 = vtanh.bf16.pop %v450
          %v459 = vtanh.bf16.pop %v451
          %v460 = vtanh.bf16.pop %v452
          %v461 = vtanh.bf16.pop %v453
          %v462 = vld [vmem:[#allocation7] sm:$0xf]
          %v463 = vld [vmem:[#allocation7 + $0x4] sm:$0xf]
          %v464 = vld [vmem:[#allocation7 + $0x8] sm:$0xf]
          %v465 = vld [vmem:[#allocation7 + $0xc] sm:$0xf]
          %v466 = vld [vmem:[%s3] sm:$0x1]
          %v468 = vlaneseq
          %v469 = vshrl.u32 %v468, 7
          %v470 = vsub.s32 0, %v469
          %v471 = vrot.slane %v466, %v470
          %v477 = vunpack.c.l.b16 %v462
          %v478 = vunpack.c.l.b16 %v463
          %v479 = vunpack.c.l.b16 %v464
          %v480 = vunpack.c.l.b16 %v465
          %v481 = vpack.c.b16 %v478, %v477
          %v482 = vpack.c.b16 %v480, %v479
          %vm485 = vcmask 261120
          %v487 = vsel %vm485, %v454, 0
          %v490 = vsel %vm485, %v455, 0
          %v493 = vsel %vm485, %v456, 0
          %v496 = vsel %vm485, %v457, 0
          %v499 = vsel %vm485, %v458, 0
          %v502 = vsel %vm485, %v459, 0
          %v505 = vsel %vm485, %v460, 0
          %v508 = vsel %vm485, %v461, 0
          %510 = vmatprep.subr.bf16.mxu0 0
          %511 = vmatpush1.bf16.msra.mxu0 0
          %512 = vmatprep.subr.bf16.mxu0 0
          %513 = vmatpush1.bf16.msra.mxu0 0
          %514 = vmatprep.subr.bf16.mxu0 0
          %515 = vmatpush1.bf16.msra.mxu0 0
          %516 = vmatprep.subr.bf16.mxu0 0
          %517 = vmatpush1.bf16.msra.mxu0 0
          %518 = vmatprep.subr.bf16.mxu0 0
          %519 = vmatpush1.bf16.msra.mxu0 0
          %520 = vmatprep.subr.bf16.mxu0 0
          %521 = vmatpush1.bf16.msra.mxu0 0
          %522 = vmatprep.subr.bf16.mxu0 0
          %523 = vmatpush1.bf16.msra.mxu0 %v482
          %524 = vmatprep.subr.bf16.mxu0 0
          %525 = vmatpush1.bf16.msra.mxu0 %v481
          %526 = vmatprep.subr.bf16.mxu0 0
          %527 = vmatpush2.bf16.msra.mxu0 0
          %528 = vmatprep.subr.bf16.mxu0 0
          %529 = vmatpush2.bf16.msra.mxu0 0
          %530 = vmatprep.subr.bf16.mxu0 0
          %531 = vmatpush2.bf16.msra.mxu0 0
          %532 = vmatprep.subr.bf16.mxu0 0
          %533 = vmatpush2.bf16.msra.mxu0 0
          %534 = vmatprep.subr.bf16.mxu0 0
          %535 = vmatpush2.bf16.msra.mxu0 0
          %536 = vmatprep.subr.bf16.mxu0 0
          %537 = vmatpush2.bf16.msra.mxu0 0
          %538 = vmatprep.subr.bf16.mxu0 0
          %539 = vmatpush2.bf16.msra.mxu0 0
          %540 = vmatprep.subr.bf16.mxu0 0
          %541 = vmatpush2.bf16.msra.mxu0 0
          %542 = vmatprep.mubr.bf16.mxu0 0
          %543 = vmatmul.mubr.bf16.gmra.mxu0 %v487
          %v544 = vpop.f32.mrf.mxu0
          %v545 = vadd.f32 %v471, %v544
          %v546 = vpop.f32.mrf.mxu0
          %v547 = vpop.f32.mrf.mxu0
          %v548 = vadd.f32 %v471, %v547
          %v549 = vpop.f32.mrf.mxu0
          %550 = vmatprep.mubr.bf16.mxu0 0
          %551 = vmatmul.mubr.bf16.gmra.mxu0 %v490
          %v552 = vpop.f32.mrf.mxu0
          %v553 = vadd.f32 %v471, %v552
          %v554 = vpop.f32.mrf.mxu0
          %v555 = vpop.f32.mrf.mxu0
          %v556 = vadd.f32 %v471, %v555
          %v557 = vpop.f32.mrf.mxu0
          %558 = vmatprep.mubr.bf16.mxu0 0
          %559 = vmatmul.mubr.bf16.gmra.mxu0 %v493
          %v560 = vpop.f32.mrf.mxu0
          %v561 = vadd.f32 %v471, %v560
          %v562 = vpop.f32.mrf.mxu0
          %v563 = vpop.f32.mrf.mxu0
          %v564 = vadd.f32 %v471, %v563
          %v565 = vpop.f32.mrf.mxu0
          %566 = vmatprep.mubr.bf16.mxu0 0
          %567 = vmatmul.mubr.bf16.gmra.mxu0 %v496
          %v568 = vpop.f32.mrf.mxu0
          %v569 = vadd.f32 %v471, %v568
          %v570 = vpop.f32.mrf.mxu0
          %v571 = vpop.f32.mrf.mxu0
          %v572 = vadd.f32 %v471, %v571
          %v573 = vpop.f32.mrf.mxu0
          %574 = vmatprep.mubr.bf16.mxu0 0
          %575 = vmatmul.mubr.bf16.gmra.mxu0 %v499
          %v576 = vpop.f32.mrf.mxu0
          %v577 = vadd.f32 %v471, %v576
          %v578 = vpop.f32.mrf.mxu0
          %v579 = vpop.f32.mrf.mxu0
          %v580 = vadd.f32 %v471, %v579
          %v581 = vpop.f32.mrf.mxu0
          %582 = vmatprep.mubr.bf16.mxu0 0
          %583 = vmatmul.mubr.bf16.gmra.mxu0 %v502
          %v584 = vpop.f32.mrf.mxu0
          %v585 = vadd.f32 %v471, %v584
          %v586 = vpop.f32.mrf.mxu0
          %v587 = vpop.f32.mrf.mxu0
          %v588 = vadd.f32 %v471, %v587
          %v589 = vpop.f32.mrf.mxu0
          %590 = vmatprep.mubr.bf16.mxu0 0
          %591 = vmatmul.mubr.bf16.gmra.mxu0 %v505
          %v592 = vpop.f32.mrf.mxu0
          %v593 = vadd.f32 %v471, %v592
          %v594 = vpop.f32.mrf.mxu0
          %v595 = vpop.f32.mrf.mxu0
          %v596 = vadd.f32 %v471, %v595
          %v597 = vpop.f32.mrf.mxu0
          %598 = vmatprep.mubr.bf16.mxu0 0
          %599 = vmatmul.mubr.bf16.gmra.mxu0 %v508
          %v600 = vpop.f32.mrf.mxu0
          %v601 = vadd.f32 %v471, %v600
          %v602 = vpop.f32.mrf.mxu0
          %v603 = vpop.f32.mrf.mxu0
          %v604 = vadd.f32 %v471, %v603
          %v605 = vpop.f32.mrf.mxu0
          %606 = vdwg.mxu0
          %607 = vst [vmem:[%s292] sm:$0xff] %v545
          %608 = vst [vmem:[%s292 + $0x8] sm:$0xff] %v548
          %609 = vst [vmem:[%s292 + $0x10] sm:$0xff] %v553
          %610 = vst [vmem:[%s292 + $0x18] sm:$0xff] %v556
          %611 = vst [vmem:[%s292 + $0x20] sm:$0xff] %v561
          %612 = vst [vmem:[%s292 + $0x28] sm:$0xff] %v564
          %613 = vst [vmem:[%s292 + $0x30] sm:$0xff] %v569
          %614 = vst [vmem:[%s292 + $0x38] sm:$0xff] %v572
          %615 = vst [vmem:[%s292 + $0x40] sm:$0xff] %v577
          %616 = vst [vmem:[%s292 + $0x48] sm:$0xff] %v580
          %617 = vst [vmem:[%s292 + $0x50] sm:$0xff] %v585
          %618 = vst [vmem:[%s292 + $0x58] sm:$0xff] %v588
          %619 = vst [vmem:[%s292 + $0x60] sm:$0xff] %v593
          %620 = vst [vmem:[%s292 + $0x68] sm:$0xff] %v596
          %621 = vst [vmem:[%s292 + $0x70] sm:$0xff] %v601
          %622 = vst [vmem:[%s292 + $0x78] sm:$0xff] %v604
        $region52: #{tpu_custom_call.1} parent=35 // pred_fallthru
          _
        %s623 = sand.u32 %s151, 1
        %s624 = scalar_lea.sflag [#allocation4], %s623
        %s625 = sand.u32 %s151, 1
        %s626 = smul.addr %s625, 128
        %s627 = scalar_lea.vmem [#allocation8], %s626
        // Predicated region
        $region53: #{tpu_custom_call.1} parent=35 // pred_check
          %p628 = pneg %p161
        $region54: #{tpu_custom_call.1} parent=35 // pred_check_branch
          %630 = sbr.rel (%p628) target = $region56
        $region55: #{tpu_custom_call.1} parent=35 // pred_region
          %s631 = smul.u32 8, %s30
          %s632 = smul.u32 2, %s31
          %s634 = ssub.s32 2048, 2048
          %635 = vsyncadd %s624, %s634
          %s636 = smul.addr %s631, 2
          %s637 = sadd.s32 %s632, %s636
          %s638 = smul.addr %s29, 16
          %s639 = sadd.s32 %s637, %s638
          %s640 = smul.addr %s639, 128
          %s641 = scalar_lea.hbm %s4, %s640
          %s642 = sshll.u32 %s627, 4
          %s643 = int_to_ptr.vmem [resolvable:$true] %s642
          %648 = dma.vmem_to_hbm [thread:$0]  %s643, 2048, %s641, %s624, 128, 128, 8
        $region56: #{tpu_custom_call.1} parent=35 // pred_fallthru
          _
      $region36: #{tpu_custom_call.1} parent=5 // pred_fallthru
        _
      %p649 = scmp.le.s32.totalorder 2, %s19
      // Predicated region
      $region57: #{tpu_custom_call.1} parent=5 // pred_check
        %p650 = pneg %p649
      $region58: #{tpu_custom_call.1} parent=5 // pred_check_branch
        %652 = sbr.rel (%p650) target = $region60
      $region59: #{tpu_custom_call.1} parent=5 // pred_region
        %s653 = ssub.s32 %s19, 2
        // Predicated region
        $region61: #{tpu_custom_call.1} parent=59 // pred_check
          %p654 = pneg %p167
        $region62: #{tpu_custom_call.1} parent=59 // pred_check_branch
          %656 = sbr.rel (%p654) target = $region64
        $region63: #{tpu_custom_call.1} parent=59 // pred_region
          %s657 = sand.u32 %s152, 1
          %s658 = scalar_lea.sflag [#allocation4], %s657
          %s659 = sand.u32 %s152, 1
          %s660 = smul.addr %s659, 128
          %s661 = scalar_lea.vmem [#allocation8], %s660
          %662 = dma.done %s658, 2048
        $region64: #{tpu_custom_call.1} parent=59 // pred_fallthru
          _
      $region60: #{tpu_custom_call.1} parent=5 // pred_fallthru
        _
    $region6: #{tpu_custom_call.1} parent=1 // loop_footer
      %s23 = sadd.s32 1, %s19
    $region7: #{tpu_custom_call.1} parent=1 // loop_footer_branch
      %18 = sbr.rel target = $region3
    $region8: #{tpu_custom_call.1} parent=1 // loop_exit
      _
    %663 = vsyncpa [#allocation3], 1
    %s664 = scalar_lea.sflag [#allocation3], 1
    %665 = vsyncpa %s664, 1
    %666 = vsyncpa [#allocation6], 1
    %s667 = scalar_lea.sflag [#allocation6], 1
    %668 = vsyncpa %s667, 1
    %669 = vsyncpa [#allocation4], 1
    %s670 = scalar_lea.sflag [#allocation4], 1
    %671 = vsyncpa %s670, 1

</llo_original>
